<compile_context>
chip_gen: v5e
topology: v5e:2x2
jax: 0.10.0
libtpu: 0.0.40
codegen_flags: <defaults>
</compile_context>

<pallas_src>
import math
from functools import partial

import jax
import jax.numpy as jnp
from jax import lax
from jax.experimental import pallas as pl
from jax.experimental.pallas import tpu as pltpu

F32 = jnp.float32
VMEM_SPEC = pl.BlockSpec(memory_space=pltpu.MemorySpace.VMEM)
NEG_INF = -1e30   # finite, so 0 * NEG_INF in masked gathers stays finite


# ----------------------------------------------------------------------------
# Packed-parameter layouts (128-lane-aligned segment starts)
# ----------------------------------------------------------------------------
def _align128(v):
    return ((v + 127) // 128) * 128


def _bias_layout(hid, heads, snum):
    segs = [("bx", hid), ("be", hid), ("bn_scale", snum), ("bn_shift", snum),
            ("bqkv", 3 * heads * hid), ("bout_para", hid)]
    layout, off = {}, 0
    for name, size in segs:
        layout[name] = (off, size)
        off = _align128(off + size)
    return layout, off


def _weight_layout(in_dim, edge_f, snum, hid, heads):
    d_enc = in_dim + edge_f + snum          # block-diag input feature width
    c_enc = 2 * hid + snum                  # block-diag output width
    blocks = [("w_enc", d_enc, c_enc),
              ("wqkv", snum, 3 * heads * hid),
              ("wout", heads * hid, hid)]
    rows = max(b[1] for b in blocks)
    layout, off = {}, 0
    for name, r, c in blocks:
        layout[name] = (off, r, c)
        off = _align128(off + c)
    return layout, rows, off


# ----------------------------------------------------------------------------
# The single fused kernel
# ----------------------------------------------------------------------------
def _weight_sum_kernel(data_ref, idx_col_ref, idx_row_ref, w_ref, b_ref, o_ref,
                       *, n, e, heads, hid, snum, n_graphs, in_dim, edge_f):
    wl, _, _ = _weight_layout(in_dim, edge_f, snum, hid, heads)
    bl, _ = _bias_layout(hid, heads, snum)

    def wsl(name):
        o, r, c = wl[name]
        return w_ref[0:r, o:o + c]

    def bsl(name):
        o, s = bl[name]
        return b_ref[:, o:o + s]

    src_col = idx_col_ref[0:e, :]          # [E, 1] int32
    batch_col = idx_col_ref[e:e + n, :]    # [N, 1] int32
    src_row = idx_row_ref[:, 0:e]          # [1, E] int32
    batch_row = idx_row_ref[:, e:e + n]    # [1, N] int32

    # ---- fused encoders: node / edge / score_lin as ONE block-diag matmul --
    y = jnp.dot(data_ref[...], wsl("w_enc"), preferred_element_type=F32)
    x = y[0:n, 0:hid] + bsl("bx")                                   # [N, hid]
    eemb = y[n:n + e, hid:2 * hid] + bsl("be")                      # [E, hid]
    sm = y[n + e:2 * n + e, 2 * hid:2 * hid + snum]                 # [N, snum]

    # deg = degree(row) + 1 is computed but unused by agg_edge -> omitted.

    # ---- agg_edge: gather x[src], softmax grouped by src, scatter-add ------
    mask_en_b = lax.broadcasted_iota(jnp.int32, (e, n), 1) == src_col          # [E, N]
    mask_en = mask_en_b.astype(F32)
    mask_ne = (lax.broadcasted_iota(jnp.int32, (n, e), 0) == src_row).astype(F32)  # [N, E]

    xs = jnp.dot(mask_en, x, preferred_element_type=F32)            # x[src]  [E, hid]
    es = jnp.sum(xs * eemb, axis=1, keepdims=True)                  # edge score [E, 1]
    # sparse softmax over edges grouped by src node (mask before exp)
    node_max = jnp.max(jnp.where(mask_en_b, es, NEG_INF), axis=0, keepdims=True)  # [1, N]
    edge_max = jnp.sum(mask_en * node_max, axis=1, keepdims=True)   # [E, 1]
    e_exp = jnp.exp(es - edge_max)
    node_sum = jnp.sum(mask_en * e_exp, axis=0, keepdims=True)      # [1, N]
    edge_den = jnp.sum(mask_en * node_sum, axis=1, keepdims=True) + 1e-16
    w_edge = e_exp / edge_den                                       # [E, 1]
    # index_add_(0, src, w * x[src])  ==  mask_ne @ (w * x[src])   (plain MXU dot)
    new_x = jnp.dot(mask_ne, w_edge * xs, preferred_element_type=F32)   # [N, hid]
    # F.normalize(new_x, dim=1)
    x = new_x * lax.rsqrt(jnp.maximum(
        jnp.sum(new_x * new_x, axis=1, keepdims=True), 1e-24))

    # ---- score path: BatchNorm1d (training stats); gamma*relu(column_mask)
    #      and beta*relu(column_mask) + pos folded into bn_scale / bn_shift.
    inv_n = 1.0 / n
    mean = jnp.sum(sm, axis=0, keepdims=True) * inv_n
    cen = sm - mean
    var = jnp.sum(cen * cen, axis=0, keepdims=True) * inv_n
    sm = cen * lax.rsqrt(var + 1e-5) * bsl("bn_scale") + bsl("bn_shift")

    # ---- fused q/k/v projection (one [N, snum] @ [snum, 3*H*hid] MXU pass) -
    qkv = jnp.dot(sm, wsl("wqkv"), preferred_element_type=F32) + bsl("bqkv")
    hd = heads * hid
    q = qkv[:, 0:hd]
    k = qkv[:, hd:2 * hd]
    v = qkv[:, 2 * hd:3 * hd]

    # ---- multi-head attention, per-graph sparse softmax (batched over H*H) -
    HH = heads * heads
    scale = 1.0 / math.sqrt(hid)
    col_iota = lax.broadcasted_iota(jnp.int32, (1, HH), 1)
    cols = jnp.zeros((n, HH), F32)
    for i in range(heads):
        qi = q[:, i * hid:(i + 1) * hid]
        for j in range(heads):
            kj = k[:, j * hid:(j + 1) * hid]
            cij = jnp.sum(qi * kj, axis=1, keepdims=True) * scale          # scores[:, i, j]
            cols = cols + cij * (col_iota == (i * heads + j)).astype(F32)  # place at lane i*H+j
    # per-graph softmax over nodes: one masked max/sum per graph, ONE exp
    nmax = jnp.full((n, HH), NEG_INF, F32)
    for g in range(n_graphs):
        in_g = batch_col == g                                              # [N, 1]
        gmax = jnp.max(jnp.where(in_g, cols, NEG_INF), axis=0, keepdims=True)
        nmax = jnp.where(in_g, gmax, nmax)
    e_att = jnp.exp(cols - nmax)                                           # [N, HH]
    nden = jnp.zeros((n, HH), F32)
    for g in range(n_graphs):
        in_g = batch_col == g
        gsum = jnp.sum(jnp.where(in_g, e_att, 0.0), axis=0, keepdims=True)
        nden = jnp.where(in_g, gsum, nden)
    attn = e_att / (nden + 1e-16)                                          # [N, HH]

    # ---- (attn @ v) and out-projection; self.para folded into bout_para ----
    wout_t = wsl("wout")                                                   # [H*hid, hid]
    score = jnp.zeros((n, hid), F32) + bsl("bout_para")
    for i in range(heads):
        si = jnp.zeros((n, hid), F32)
        for j in range(heads):
            si = si + attn[:, i * heads + j:i * heads + j + 1] * v[:, j * hid:(j + 1) * hid]
        score = score + jnp.dot(si, wout_t[i * hid:(i + 1) * hid, :],
                                preferred_element_type=F32)

    # ---- readout: h = normalize(score * x); per-graph sum = gmask_t @ h ----
    h = score * x
    h = h * lax.rsqrt(jnp.maximum(jnp.sum(h * h, axis=1, keepdims=True), 1e-24))
    gmask_t = (lax.broadcasted_iota(jnp.int32, (n_graphs, n), 0)
               == batch_row).astype(F32)                                   # [G, N]
    o_ref[...] = jnp.dot(gmask_t, h, preferred_element_type=F32)           # [G, hid]


# ----------------------------------------------------------------------------
# One-time parameter packing (PyTorch layout -> two VMEM slabs)
# ----------------------------------------------------------------------------
def prepare_params(p):
    W_x = jnp.asarray(p["W_x"], F32); b_x = jnp.asarray(p["b_x"], F32)
    W_e = jnp.asarray(p["W_e"], F32); b_e = jnp.asarray(p["b_e"], F32)
    W_lin = jnp.asarray(p["W_lin"], F32)
    bn_gamma = jnp.asarray(p["bn_gamma"], F32)
    bn_beta = jnp.asarray(p["bn_beta"], F32)
    column_mask = jnp.asarray(p["column_mask"], F32)
    pos = jnp.asarray(p["pos"], F32).reshape(-1)
    Wq = jnp.asarray(p["Wq"], F32); bq = jnp.asarray(p["bq"], F32)
    Wk = jnp.asarray(p["Wk"], F32); bk = jnp.asarray(p["bk"], F32)
    Wv = jnp.asarray(p["Wv"], F32); bv = jnp.asarray(p["bv"], F32)
    W_out = jnp.asarray(p["W_out"], F32); b_out = jnp.asarray(p["b_out"], F32)
    para = jnp.asarray(p["para"], F32).reshape(-1)

    hid, in_dim = W_x.shape
    edge_f = W_e.shape[1]
    snum = W_lin.shape[0]
    heads = Wq.shape[0] // hid

    # ---- weight slab (blocks at 128-lane-aligned column offsets) -----------
    wl, rows, wcols = _weight_layout(in_dim, edge_f, snum, hid, heads)
    wslab = jnp.zeros((rows, wcols), F32)
    o, r, c = wl["w_enc"]
    enc = jnp.zeros((r, c), F32)
    enc = enc.at[0:in_dim, 0:hid].set(W_x.T)
    enc = enc.at[in_dim:in_dim + edge_f, hid:2 * hid].set(W_e.T)
    enc = enc.at[in_dim + edge_f:, 2 * hid:].set(W_lin.T)
    wslab = wslab.at[0:r, o:o + c].set(enc)
    o, r, c = wl["wqkv"]
    wslab = wslab.at[0:r, o:o + c].set(jnp.concatenate([Wq.T, Wk.T, Wv.T], axis=1))
    o, r, c = wl["wout"]
    wslab = wslab.at[0:r, o:o + c].set(W_out.T)

    # ---- bias slab (relu(column_mask), BN affine and pos folded in) --------
    bl, bcols = _bias_layout(hid, heads, snum)
    mrelu = jnp.maximum(column_mask, 0.0)
    segs = {
        "bx": b_x,
        "be": b_e,
        "bn_scale": bn_gamma * mrelu,
        "bn_shift": bn_beta * mrelu + pos,
        "bqkv": jnp.concatenate([bq, bk, bv]),
        "bout_para": b_out + para,          # self.out bias + self.para
    }
    bslab = jnp.zeros((1, bcols), F32)
    for name, vec in segs.items():
        o, s = bl[name]
        bslab = bslab.at[0, o:o + s].set(vec)

    return {"weights": wslab, "biases": bslab}


# ----------------------------------------------------------------------------
# Forward pass: one fused pallas_call, 5 inputs
# ----------------------------------------------------------------------------
def weight_sum_forward(pp, init_x, edge_index, edge_attr, batch_ids, centrality,
                       *, heads, hid_dim, score_nums, n_graphs):
    n, in_dim = init_x.shape
    e, edge_f = edge_attr.shape
    hid, snum = hid_dim, score_nums
    d_enc = in_dim + edge_f + snum

    # block-diagonal data slab: rows [init_x ; edge_attr ; centrality[:, :snum]]
    data = jnp.zeros((2 * n + e, d_enc), F32)
    data = data.at[0:n, 0:in_dim].set(init_x.astype(F32))
    data = data.at[n:n + e, in_dim:in_dim + edge_f].set(edge_attr.astype(F32))
    data = data.at[n + e:, in_dim + edge_f:].set(centrality[:, 0:snum].astype(F32))

    idx = jnp.concatenate([edge_index[0].astype(jnp.int32),
                           batch_ids.astype(jnp.int32)])
    idx_col = idx[:, None]            # [E+N, 1]
    idx_row = idx[None, :]            # [1, E+N]

    kernel = partial(_weight_sum_kernel, n=n, e=e, heads=heads, hid=hid,
                     snum=snum, n_graphs=n_graphs, in_dim=in_dim, edge_f=edge_f)

    flops = 2 * ((2 * n + e) * d_enc * (2 * hid + snum)      # fused encoders
                 + e * n * hid                               # gather x[src]
                 + n * e * hid                               # scatter-add
                 + n * snum * 3 * heads * hid                # fused qkv
                 + heads * n * hid * hid                     # out projection
                 + n_graphs * n * hid)                       # readout
    cost = pl.CostEstimate(
        flops=int(flops),
        transcendentals=int(e + n * (heads * heads + 3)),
        bytes_accessed=int(4 * (data.size + 2 * idx.size + pp["weights"].size
                                + pp["biases"].size + n_graphs * hid)))

    return pl.pallas_call(
        kernel,
        out_shape=jax.ShapeDtypeStruct((n_graphs, hid), F32),
        in_specs=[VMEM_SPEC] * 5,
        out_specs=VMEM_SPEC,
        cost_estimate=cost,
    )(data, idx_col, idx_row, pp["weights"], pp["biases"])


# ----------------------------------------------------------------------------
if __name__ == "__main__":
    N, E, G = 16, 32, 2
    IN_DIM, HID, S, H, EDGE_F = 10, 32, 10, 2, 4

    key = jax.random.PRNGKey(0)
    keys = jax.random.split(key, 16)

    def rand(k, shape, scale=0.1):
        return scale * jax.random.normal(k, shape, dtype=F32)

    params = {
        "W_x": rand(keys[0], (HID, IN_DIM)),   "b_x": rand(keys[1], (HID,)),
        "W_e": rand(keys[2], (HID, EDGE_F)),   "b_e": rand(keys[3], (HID,)),
        "W_lin": rand(keys[4], (S, S)),
        "bn_gamma": jnp.ones((S,), F32),       "bn_beta": jnp.zeros((S,), F32),
        "column_mask": jnp.ones((S,), F32),    # nn.Parameter(torch.ones(score_nums))
        "pos": rand(keys[5], (1, S), 1.0),
        "Wq": rand(keys[6], (H * HID, S)),     "bq": rand(keys[7], (H * HID,)),
        "Wk": rand(keys[8], (H * HID, S)),     "bk": rand(keys[9], (H * HID,)),
        "Wv": rand(keys[10], (H * HID, S)),    "bv": rand(keys[11], (H * HID,)),
        "W_out": rand(keys[12], (HID, H * HID)), "b_out": rand(keys[13], (HID,)),
        "para": rand(keys[14], (1, HID), 1.0),
    }
    prepped = prepare_params(params)   # one-time packing (not per forward)

    ikeys = jax.random.split(keys[15], 4)
    init_x = jax.random.normal(ikeys[0], (N, IN_DIM), dtype=F32)
    edge_index = jax.random.randint(ikeys[1], (2, E), 0, N, dtype=jnp.int32)
    edge_attr = jax.random.normal(ikeys[2], (E, EDGE_F), dtype=F32)
    centrality = jax.random.normal(ikeys[3], (N, S), dtype=F32)
    batch_ids = jnp.concatenate(
        [jnp.zeros(N // 2, jnp.int32), jnp.ones(N // 2, jnp.int32)])

    fwd = jax.jit(partial(weight_sum_forward, heads=H, hid_dim=HID,
                          score_nums=S, n_graphs=G))
    out = fwd(prepped, init_x, edge_index, edge_attr, batch_ids, centrality)
    out = jax.block_until_ready(out)
    assert out.shape == (G, HID) and out.dtype == F32
    assert bool(jnp.all(jnp.isfinite(out)))
    print("KERNEL_OK")
</pallas_src>

<mosaic_0001>
module attributes {stable_mosaic.version = 11 : i64} {
  func.func @_weight_sum_kernel(%arg0: memref<64x24xf32, #tpu.memory_space<vmem>>, %arg1: memref<48x1xi32, #tpu.memory_space<vmem>>, %arg2: memref<1x48xi32, #tpu.memory_space<vmem>>, %arg3: memref<64x512xf32, #tpu.memory_space<vmem>>, %arg4: memref<1x896xf32, #tpu.memory_space<vmem>>, %arg5: memref<2x32xf32, #tpu.memory_space<vmem>>) attributes {dimension_semantics = [], scalar_prefetch = 0 : i64, scratch_operands = 0 : i64, tpu.core_type = #tpu.core_type<tc>} {
    %c0 = arith.constant 0 : index
    %c0_0 = arith.constant 0 : index
    %0 = vector.load %arg1[%c0, %c0_0] : memref<48x1xi32, #tpu.memory_space<vmem>>, vector<32x1xi32>
    %c32 = arith.constant 32 : index
    %c0_1 = arith.constant 0 : index
    %1 = vector.load %arg1[%c32, %c0_1] : memref<48x1xi32, #tpu.memory_space<vmem>>, vector<16x1xi32>
    %c0_2 = arith.constant 0 : index
    %c0_3 = arith.constant 0 : index
    %2 = vector.load %arg2[%c0_2, %c0_3] : memref<1x48xi32, #tpu.memory_space<vmem>>, vector<1x32xi32>
    %c0_4 = arith.constant 0 : index
    %c32_5 = arith.constant 32 : index
    %3 = vector.load %arg2[%c0_4, %c32_5] : memref<1x48xi32, #tpu.memory_space<vmem>>, vector<1x16xi32>
    %c0_6 = arith.constant 0 : index
    %c0_7 = arith.constant 0 : index
    %4 = vector.load %arg0[%c0_6, %c0_7] : memref<64x24xf32, #tpu.memory_space<vmem>>, vector<64x24xf32>
    %c0_8 = arith.constant 0 : index
    %c0_9 = arith.constant 0 : index
    %5 = vector.load %arg3[%c0_8, %c0_9] : memref<64x512xf32, #tpu.memory_space<vmem>>, vector<24x74xf32>
    %cst = arith.constant dense<0.000000e+00> : vector<64x74xf32>
    %6 = tpu.matmul %4, %5, %cst {dimension_numbers = #tpu.dot_dimension_numbers<[1], [0], [0], [1], [0, 0, 1, 1], [], []>} : vector<64x24xf32>, vector<24x74xf32>, vector<64x74xf32> -> vector<64x74xf32>
    %7 = vector.extract_strided_slice %6 {offsets = [0, 0], sizes = [16, 32], strides = [1, 1]} : vector<64x74xf32> to vector<16x32xf32>
    %c0_10 = arith.constant 0 : index
    %c0_11 = arith.constant 0 : index
    %8 = vector.load %arg4[%c0_10, %c0_11] : memref<1x896xf32, #tpu.memory_space<vmem>>, vector<1x32xf32>
    %9 = vector.broadcast %8 : vector<1x32xf32> to vector<16x32xf32>
    %10 = arith.addf %7, %9 : vector<16x32xf32>
    %11 = vector.extract_strided_slice %6 {offsets = [16, 32], sizes = [32, 32], strides = [1, 1]} : vector<64x74xf32> to vector<32x32xf32>
    %c0_12 = arith.constant 0 : index
    %c128 = arith.constant 128 : index
    %12 = vector.load %arg4[%c0_12, %c128] : memref<1x896xf32, #tpu.memory_space<vmem>>, vector<1x32xf32>
    %13 = vector.broadcast %12 : vector<1x32xf32> to vector<32x32xf32>
    %14 = arith.addf %11, %13 : vector<32x32xf32>
    %15 = vector.extract_strided_slice %6 {offsets = [48, 64], sizes = [16, 10], strides = [1, 1]} : vector<64x74xf32> to vector<16x10xf32>
    %16 = tpu.iota {dimensions = array<i32: 1>} : vector<32x16xi32>
    %17 = vector.broadcast %0 : vector<32x1xi32> to vector<32x16xi32>
    %18 = arith.cmpi eq, %16, %17 : vector<32x16xi32>
    %19 = arith.extui %18 : vector<32x16xi1> to vector<32x16xi32>
    %20 = arith.sitofp %19 : vector<32x16xi32> to vector<32x16xf32>
    %21 = tpu.iota {dimensions = array<i32: 0>} : vector<16x32xi32>
    %22 = vector.broadcast %2 : vector<1x32xi32> to vector<16x32xi32>
    %23 = arith.cmpi eq, %21, %22 : vector<16x32xi32>
    %24 = arith.extui %23 : vector<16x32xi1> to vector<16x32xi32>
    %25 = arith.sitofp %24 : vector<16x32xi32> to vector<16x32xf32>
    %cst_13 = arith.constant dense<0.000000e+00> : vector<32x32xf32>
    %26 = tpu.matmul %20, %10, %cst_13 {dimension_numbers = #tpu.dot_dimension_numbers<[1], [0], [0], [1], [0, 0, 1, 1], [], []>} : vector<32x16xf32>, vector<16x32xf32>, vector<32x32xf32> -> vector<32x32xf32>
    %27 = arith.mulf %26, %14 : vector<32x32xf32>
    %cst_14 = arith.constant dense<0.000000e+00> : vector<32xf32>
    %28 = vector.multi_reduction <add>, %27, %cst_14 [1] : vector<32x32xf32> to vector<32xf32>
    %29 = vector.shape_cast %28 : vector<32xf32> to vector<32x1xf32>
    %cst_15 = arith.constant -1.000000e+30 : f32
    %30 = vector.shape_cast %29 : vector<32x1xf32> to vector<32x1xf32>
    %31 = vector.broadcast %30 : vector<32x1xf32> to vector<32x16xf32>
    %32 = vector.broadcast %cst_15 : f32 to vector<32x16xf32>
    %33 = arith.select %18, %31, %32 : vector<32x16xi1>, vector<32x16xf32>
    %cst_16 = arith.constant dense<0xFF800000> : vector<16xf32>
    %34 = vector.multi_reduction <maximumf>, %33, %cst_16 [0] : vector<32x16xf32> to vector<16xf32>
    %35 = vector.shape_cast %34 : vector<16xf32> to vector<1x16xf32>
    %36 = vector.broadcast %35 : vector<1x16xf32> to vector<32x16xf32>
    %37 = arith.mulf %20, %36 : vector<32x16xf32>
    %cst_17 = arith.constant dense<0.000000e+00> : vector<32xf32>
    %38 = vector.multi_reduction <add>, %37, %cst_17 [1] : vector<32x16xf32> to vector<32xf32>
    %39 = vector.shape_cast %38 : vector<32xf32> to vector<32x1xf32>
    %40 = arith.subf %29, %39 : vector<32x1xf32>
    %41 = math.exp %40 : vector<32x1xf32>
    %42 = vector.broadcast %41 : vector<32x1xf32> to vector<32x16xf32>
    %43 = arith.mulf %20, %42 : vector<32x16xf32>
    %cst_18 = arith.constant dense<0.000000e+00> : vector<16xf32>
    %44 = vector.multi_reduction <add>, %43, %cst_18 [0] : vector<32x16xf32> to vector<16xf32>
    %45 = vector.shape_cast %44 : vector<16xf32> to vector<1x16xf32>
    %46 = vector.broadcast %45 : vector<1x16xf32> to vector<32x16xf32>
    %47 = arith.mulf %20, %46 : vector<32x16xf32>
    %cst_19 = arith.constant dense<0.000000e+00> : vector<32xf32>
    %48 = vector.multi_reduction <add>, %47, %cst_19 [1] : vector<32x16xf32> to vector<32xf32>
    %49 = vector.shape_cast %48 : vector<32xf32> to vector<32x1xf32>
    %cst_20 = arith.constant 1.000000e-16 : f32
    %50 = vector.broadcast %cst_20 : f32 to vector<32x1xf32>
    %51 = arith.addf %49, %50 : vector<32x1xf32>
    %52 = arith.divf %41, %51 : vector<32x1xf32>
    %53 = vector.broadcast %52 : vector<32x1xf32> to vector<32x32xf32>
    %54 = arith.mulf %53, %26 : vector<32x32xf32>
    %cst_21 = arith.constant dense<0.000000e+00> : vector<16x32xf32>
    %55 = tpu.matmul %25, %54, %cst_21 {dimension_numbers = #tpu.dot_dimension_numbers<[1], [0], [0], [1], [0, 0, 1, 1], [], []>} : vector<16x32xf32>, vector<32x32xf32>, vector<16x32xf32> -> vector<16x32xf32>
    %56 = arith.mulf %55, %55 : vector<16x32xf32>
    %cst_22 = arith.constant dense<0.000000e+00> : vector<16xf32>
    %57 = vector.multi_reduction <add>, %56, %cst_22 [1] : vector<16x32xf32> to vector<16xf32>
    %58 = vector.shape_cast %57 : vector<16xf32> to vector<16x1xf32>
    %cst_23 = arith.constant 1.000000e-24 : f32
    %59 = vector.broadcast %cst_23 : f32 to vector<16x1xf32>
    %60 = arith.maximumf %58, %59 : vector<16x1xf32>
    %61 = math.rsqrt %60 : vector<16x1xf32>
    %62 = vector.broadcast %61 : vector<16x1xf32> to vector<16x32xf32>
    %63 = arith.mulf %55, %62 : vector<16x32xf32>
    %cst_24 = arith.constant dense<0.000000e+00> : vector<10xf32>
    %64 = vector.multi_reduction <add>, %15, %cst_24 [0] : vector<16x10xf32> to vector<10xf32>
    %65 = vector.shape_cast %64 : vector<10xf32> to vector<1x10xf32>
    %cst_25 = arith.constant 6.250000e-02 : f32
    %66 = vector.broadcast %cst_25 : f32 to vector<1x10xf32>
    %67 = arith.mulf %65, %66 : vector<1x10xf32>
    %68 = vector.broadcast %67 : vector<1x10xf32> to vector<16x10xf32>
    %69 = arith.subf %15, %68 : vector<16x10xf32>
    %70 = arith.mulf %69, %69 : vector<16x10xf32>
    %cst_26 = arith.constant dense<0.000000e+00> : vector<10xf32>
    %71 = vector.multi_reduction <add>, %70, %cst_26 [0] : vector<16x10xf32> to vector<10xf32>
    %72 = vector.shape_cast %71 : vector<10xf32> to vector<1x10xf32>
    %cst_27 = arith.constant 6.250000e-02 : f32
    %73 = vector.broadcast %cst_27 : f32 to vector<1x10xf32>
    %74 = arith.mulf %72, %73 : vector<1x10xf32>
    %cst_28 = arith.constant 9.99999974E-6 : f32
    %75 = vector.broadcast %cst_28 : f32 to vector<1x10xf32>
    %76 = arith.addf %74, %75 : vector<1x10xf32>
    %77 = math.rsqrt %76 : vector<1x10xf32>
    %78 = vector.broadcast %77 : vector<1x10xf32> to vector<16x10xf32>
    %79 = arith.mulf %69, %78 : vector<16x10xf32>
    %c0_29 = arith.constant 0 : index
    %c256 = arith.constant 256 : index
    %80 = vector.load %arg4[%c0_29, %c256] : memref<1x896xf32, #tpu.memory_space<vmem>>, vector<1x10xf32>
    %81 = vector.broadcast %80 : vector<1x10xf32> to vector<16x10xf32>
    %82 = arith.mulf %79, %81 : vector<16x10xf32>
    %c0_30 = arith.constant 0 : index
    %c384 = arith.constant 384 : index
    %83 = vector.load %arg4[%c0_30, %c384] : memref<1x896xf32, #tpu.memory_space<vmem>>, vector<1x10xf32>
    %84 = vector.broadcast %83 : vector<1x10xf32> to vector<16x10xf32>
    %85 = arith.addf %82, %84 : vector<16x10xf32>
    %c0_31 = arith.constant 0 : index
    %c128_32 = arith.constant 128 : index
    %86 = vector.load %arg3[%c0_31, %c128_32] : memref<64x512xf32, #tpu.memory_space<vmem>>, vector<10x192xf32>
    %cst_33 = arith.constant dense<0.000000e+00> : vector<16x192xf32>
    %87 = tpu.matmul %85, %86, %cst_33 {dimension_numbers = #tpu.dot_dimension_numbers<[1], [0], [0], [1], [0, 0, 1, 1], [], []>} : vector<16x10xf32>, vector<10x192xf32>, vector<16x192xf32> -> vector<16x192xf32>
    %c0_34 = arith.constant 0 : index
    %c512 = arith.constant 512 : index
    %88 = vector.load %arg4[%c0_34, %c512] : memref<1x896xf32, #tpu.memory_space<vmem>>, vector<1x192xf32>
    %89 = vector.broadcast %88 : vector<1x192xf32> to vector<16x192xf32>
    %90 = arith.addf %87, %89 : vector<16x192xf32>
    %91 = vector.extract_strided_slice %90 {offsets = [0, 0], sizes = [16, 64], strides = [1, 1]} : vector<16x192xf32> to vector<16x64xf32>
    %92 = vector.extract_strided_slice %90 {offsets = [0, 64], sizes = [16, 64], strides = [1, 1]} : vector<16x192xf32> to vector<16x64xf32>
    %93 = vector.extract_strided_slice %90 {offsets = [0, 128], sizes = [16, 64], strides = [1, 1]} : vector<16x192xf32> to vector<16x64xf32>
    %94 = tpu.iota {dimensions = array<i32: 1>} : vector<1x4xi32>
    %cst_35 = arith.constant 0.000000e+00 : f32
    %95 = vector.broadcast %cst_35 : f32 to vector<16x4xf32>
    %96 = vector.extract_strided_slice %91 {offsets = [0, 0], sizes = [16, 32], strides = [1, 1]} : vector<16x64xf32> to vector<16x32xf32>
    %97 = vector.extract_strided_slice %92 {offsets = [0, 0], sizes = [16, 32], strides = [1, 1]} : vector<16x64xf32> to vector<16x32xf32>
    %98 = arith.mulf %96, %97 : vector<16x32xf32>
    %cst_36 = arith.constant dense<0.000000e+00> : vector<16xf32>
    %99 = vector.multi_reduction <add>, %98, %cst_36 [1] : vector<16x32xf32> to vector<16xf32>
    %100 = vector.shape_cast %99 : vector<16xf32> to vector<16x1xf32>
    %cst_37 = arith.constant 0.176776692 : f32
    %101 = vector.broadcast %cst_37 : f32 to vector<16x1xf32>
    %102 = arith.mulf %100, %101 : vector<16x1xf32>
    %c0_i32 = arith.constant 0 : i32
    %103 = vector.broadcast %c0_i32 : i32 to vector<1x4xi32>
    %104 = arith.cmpi eq, %94, %103 : vector<1x4xi32>
    %105 = arith.extui %104 : vector<1x4xi1> to vector<1x4xi32>
    %106 = arith.sitofp %105 : vector<1x4xi32> to vector<1x4xf32>
    %107 = vector.broadcast %102 : vector<16x1xf32> to vector<16x4xf32>
    %108 = vector.broadcast %106 : vector<1x4xf32> to vector<16x4xf32>
    %109 = arith.mulf %107, %108 : vector<16x4xf32>
    %110 = arith.addf %95, %109 : vector<16x4xf32>
    %111 = vector.extract_strided_slice %92 {offsets = [0, 32], sizes = [16, 32], strides = [1, 1]} : vector<16x64xf32> to vector<16x32xf32>
    %112 = arith.mulf %96, %111 : vector<16x32xf32>
    %cst_38 = arith.constant dense<0.000000e+00> : vector<16xf32>
    %113 = vector.multi_reduction <add>, %112, %cst_38 [1] : vector<16x32xf32> to vector<16xf32>
    %114 = vector.shape_cast %113 : vector<16xf32> to vector<16x1xf32>
    %cst_39 = arith.constant 0.176776692 : f32
    %115 = vector.broadcast %cst_39 : f32 to vector<16x1xf32>
    %116 = arith.mulf %114, %115 : vector<16x1xf32>
    %c1_i32 = arith.constant 1 : i32
    %117 = vector.broadcast %c1_i32 : i32 to vector<1x4xi32>
    %118 = arith.cmpi eq, %94, %117 : vector<1x4xi32>
    %119 = arith.extui %118 : vector<1x4xi1> to vector<1x4xi32>
    %120 = arith.sitofp %119 : vector<1x4xi32> to vector<1x4xf32>
    %121 = vector.broadcast %116 : vector<16x1xf32> to vector<16x4xf32>
    %122 = vector.broadcast %120 : vector<1x4xf32> to vector<16x4xf32>
    %123 = arith.mulf %121, %122 : vector<16x4xf32>
    %124 = arith.addf %110, %123 : vector<16x4xf32>
    %125 = vector.extract_strided_slice %91 {offsets = [0, 32], sizes = [16, 32], strides = [1, 1]} : vector<16x64xf32> to vector<16x32xf32>
    %126 = vector.extract_strided_slice %92 {offsets = [0, 0], sizes = [16, 32], strides = [1, 1]} : vector<16x64xf32> to vector<16x32xf32>
    %127 = arith.mulf %125, %126 : vector<16x32xf32>
    %cst_40 = arith.constant dense<0.000000e+00> : vector<16xf32>
    %128 = vector.multi_reduction <add>, %127, %cst_40 [1] : vector<16x32xf32> to vector<16xf32>
    %129 = vector.shape_cast %128 : vector<16xf32> to vector<16x1xf32>
    %cst_41 = arith.constant 0.176776692 : f32
    %130 = vector.broadcast %cst_41 : f32 to vector<16x1xf32>
    %131 = arith.mulf %129, %130 : vector<16x1xf32>
    %c2_i32 = arith.constant 2 : i32
    %132 = vector.broadcast %c2_i32 : i32 to vector<1x4xi32>
    %133 = arith.cmpi eq, %94, %132 : vector<1x4xi32>
    %134 = arith.extui %133 : vector<1x4xi1> to vector<1x4xi32>
    %135 = arith.sitofp %134 : vector<1x4xi32> to vector<1x4xf32>
    %136 = vector.broadcast %131 : vector<16x1xf32> to vector<16x4xf32>
    %137 = vector.broadcast %135 : vector<1x4xf32> to vector<16x4xf32>
    %138 = arith.mulf %136, %137 : vector<16x4xf32>
    %139 = arith.addf %124, %138 : vector<16x4xf32>
    %140 = vector.extract_strided_slice %92 {offsets = [0, 32], sizes = [16, 32], strides = [1, 1]} : vector<16x64xf32> to vector<16x32xf32>
    %141 = arith.mulf %125, %140 : vector<16x32xf32>
    %cst_42 = arith.constant dense<0.000000e+00> : vector<16xf32>
    %142 = vector.multi_reduction <add>, %141, %cst_42 [1] : vector<16x32xf32> to vector<16xf32>
    %143 = vector.shape_cast %142 : vector<16xf32> to vector<16x1xf32>
    %cst_43 = arith.constant 0.176776692 : f32
    %144 = vector.broadcast %cst_43 : f32 to vector<16x1xf32>
    %145 = arith.mulf %143, %144 : vector<16x1xf32>
    %c3_i32 = arith.constant 3 : i32
    %146 = vector.broadcast %c3_i32 : i32 to vector<1x4xi32>
    %147 = arith.cmpi eq, %94, %146 : vector<1x4xi32>
    %148 = arith.extui %147 : vector<1x4xi1> to vector<1x4xi32>
    %149 = arith.sitofp %148 : vector<1x4xi32> to vector<1x4xf32>
    %150 = vector.broadcast %145 : vector<16x1xf32> to vector<16x4xf32>
    %151 = vector.broadcast %149 : vector<1x4xf32> to vector<16x4xf32>
    %152 = arith.mulf %150, %151 : vector<16x4xf32>
    %153 = arith.addf %139, %152 : vector<16x4xf32>
    %cst_44 = arith.constant -1.000000e+30 : f32
    %154 = vector.broadcast %cst_44 : f32 to vector<16x4xf32>
    %c0_i32_45 = arith.constant 0 : i32
    %155 = vector.broadcast %c0_i32_45 : i32 to vector<16x1xi32>
    %156 = arith.cmpi eq, %1, %155 : vector<16x1xi32>
    %cst_46 = arith.constant -1.000000e+30 : f32
    %157 = vector.shape_cast %156 : vector<16x1xi1> to vector<16x1xi1>
    %158 = vector.broadcast %157 : vector<16x1xi1> to vector<16x4xi1>
    %159 = vector.broadcast %cst_46 : f32 to vector<16x4xf32>
    %160 = arith.select %158, %153, %159 : vector<16x4xi1>, vector<16x4xf32>
    %cst_47 = arith.constant dense<0xFF800000> : vector<4xf32>
    %161 = vector.multi_reduction <maximumf>, %160, %cst_47 [0] : vector<16x4xf32> to vector<4xf32>
    %162 = vector.shape_cast %161 : vector<4xf32> to vector<1x4xf32>
    %163 = vector.shape_cast %156 : vector<16x1xi1> to vector<16x1xi1>
    %164 = vector.broadcast %163 : vector<16x1xi1> to vector<16x4xi1>
    %165 = vector.shape_cast %162 : vector<1x4xf32> to vector<1x4xf32>
    %166 = vector.broadcast %165 : vector<1x4xf32> to vector<16x4xf32>
    %167 = arith.select %164, %166, %154 : vector<16x4xi1>, vector<16x4xf32>
    %c1_i32_48 = arith.constant 1 : i32
    %168 = vector.broadcast %c1_i32_48 : i32 to vector<16x1xi32>
    %169 = arith.cmpi eq, %1, %168 : vector<16x1xi32>
    %cst_49 = arith.constant -1.000000e+30 : f32
    %170 = vector.shape_cast %169 : vector<16x1xi1> to vector<16x1xi1>
    %171 = vector.broadcast %170 : vector<16x1xi1> to vector<16x4xi1>
    %172 = vector.broadcast %cst_49 : f32 to vector<16x4xf32>
    %173 = arith.select %171, %153, %172 : vector<16x4xi1>, vector<16x4xf32>
    %cst_50 = arith.constant dense<0xFF800000> : vector<4xf32>
    %174 = vector.multi_reduction <maximumf>, %173, %cst_50 [0] : vector<16x4xf32> to vector<4xf32>
    %175 = vector.shape_cast %174 : vector<4xf32> to vector<1x4xf32>
    %176 = vector.shape_cast %169 : vector<16x1xi1> to vector<16x1xi1>
    %177 = vector.broadcast %176 : vector<16x1xi1> to vector<16x4xi1>
    %178 = vector.shape_cast %175 : vector<1x4xf32> to vector<1x4xf32>
    %179 = vector.broadcast %178 : vector<1x4xf32> to vector<16x4xf32>
    %180 = arith.select %177, %179, %167 : vector<16x4xi1>, vector<16x4xf32>
    %181 = arith.subf %153, %180 : vector<16x4xf32>
    %182 = math.exp %181 : vector<16x4xf32>
    %cst_51 = arith.constant 0.000000e+00 : f32
    %183 = vector.broadcast %cst_51 : f32 to vector<16x4xf32>
    %c0_i32_52 = arith.constant 0 : i32
    %184 = vector.broadcast %c0_i32_52 : i32 to vector<16x1xi32>
    %185 = arith.cmpi eq, %1, %184 : vector<16x1xi32>
    %cst_53 = arith.constant 0.000000e+00 : f32
    %186 = vector.shape_cast %185 : vector<16x1xi1> to vector<16x1xi1>
    %187 = vector.broadcast %186 : vector<16x1xi1> to vector<16x4xi1>
    %188 = vector.broadcast %cst_53 : f32 to vector<16x4xf32>
    %189 = arith.select %187, %182, %188 : vector<16x4xi1>, vector<16x4xf32>
    %cst_54 = arith.constant dense<0.000000e+00> : vector<4xf32>
    %190 = vector.multi_reduction <add>, %189, %cst_54 [0] : vector<16x4xf32> to vector<4xf32>
    %191 = vector.shape_cast %190 : vector<4xf32> to vector<1x4xf32>
    %192 = vector.shape_cast %185 : vector<16x1xi1> to vector<16x1xi1>
    %193 = vector.broadcast %192 : vector<16x1xi1> to vector<16x4xi1>
    %194 = vector.shape_cast %191 : vector<1x4xf32> to vector<1x4xf32>
    %195 = vector.broadcast %194 : vector<1x4xf32> to vector<16x4xf32>
    %196 = arith.select %193, %195, %183 : vector<16x4xi1>, vector<16x4xf32>
    %c1_i32_55 = arith.constant 1 : i32
    %197 = vector.broadcast %c1_i32_55 : i32 to vector<16x1xi32>
    %198 = arith.cmpi eq, %1, %197 : vector<16x1xi32>
    %cst_56 = arith.constant 0.000000e+00 : f32
    %199 = vector.shape_cast %198 : vector<16x1xi1> to vector<16x1xi1>
    %200 = vector.broadcast %199 : vector<16x1xi1> to vector<16x4xi1>
    %201 = vector.broadcast %cst_56 : f32 to vector<16x4xf32>
    %202 = arith.select %200, %182, %201 : vector<16x4xi1>, vector<16x4xf32>
    %cst_57 = arith.constant dense<0.000000e+00> : vector<4xf32>
    %203 = vector.multi_reduction <add>, %202, %cst_57 [0] : vector<16x4xf32> to vector<4xf32>
    %204 = vector.shape_cast %203 : vector<4xf32> to vector<1x4xf32>
    %205 = vector.shape_cast %198 : vector<16x1xi1> to vector<16x1xi1>
    %206 = vector.broadcast %205 : vector<16x1xi1> to vector<16x4xi1>
    %207 = vector.shape_cast %204 : vector<1x4xf32> to vector<1x4xf32>
    %208 = vector.broadcast %207 : vector<1x4xf32> to vector<16x4xf32>
    %209 = arith.select %206, %208, %196 : vector<16x4xi1>, vector<16x4xf32>
    %cst_58 = arith.constant 1.000000e-16 : f32
    %210 = vector.broadcast %cst_58 : f32 to vector<16x4xf32>
    %211 = arith.addf %209, %210 : vector<16x4xf32>
    %212 = arith.divf %182, %211 : vector<16x4xf32>
    %c0_59 = arith.constant 0 : index
    %c384_60 = arith.constant 384 : index
    %213 = vector.load %arg3[%c0_59, %c384_60] : memref<64x512xf32, #tpu.memory_space<vmem>>, vector<64x32xf32>
    %cst_61 = arith.constant 0.000000e+00 : f32
    %214 = vector.broadcast %cst_61 : f32 to vector<16x32xf32>
    %c0_62 = arith.constant 0 : index
    %c768 = arith.constant 768 : index
    %215 = vector.load %arg4[%c0_62, %c768] : memref<1x896xf32, #tpu.memory_space<vmem>>, vector<1x32xf32>
    %216 = vector.broadcast %215 : vector<1x32xf32> to vector<16x32xf32>
    %217 = arith.addf %214, %216 : vector<16x32xf32>
    %cst_63 = arith.constant 0.000000e+00 : f32
    %218 = vector.broadcast %cst_63 : f32 to vector<16x32xf32>
    %219 = vector.extract_strided_slice %212 {offsets = [0, 0], sizes = [16, 1], strides = [1, 1]} : vector<16x4xf32> to vector<16x1xf32>
    %220 = vector.extract_strided_slice %93 {offsets = [0, 0], sizes = [16, 32], strides = [1, 1]} : vector<16x64xf32> to vector<16x32xf32>
    %221 = vector.broadcast %219 : vector<16x1xf32> to vector<16x32xf32>
    %222 = arith.mulf %221, %220 : vector<16x32xf32>
    %223 = arith.addf %218, %222 : vector<16x32xf32>
    %224 = vector.extract_strided_slice %212 {offsets = [0, 1], sizes = [16, 1], strides = [1, 1]} : vector<16x4xf32> to vector<16x1xf32>
    %225 = vector.extract_strided_slice %93 {offsets = [0, 32], sizes = [16, 32], strides = [1, 1]} : vector<16x64xf32> to vector<16x32xf32>
    %226 = vector.broadcast %224 : vector<16x1xf32> to vector<16x32xf32>
    %227 = arith.mulf %226, %225 : vector<16x32xf32>
    %228 = arith.addf %223, %227 : vector<16x32xf32>
    %229 = vector.extract_strided_slice %213 {offsets = [0, 0], sizes = [32, 32], strides = [1, 1]} : vector<64x32xf32> to vector<32x32xf32>
    %cst_64 = arith.constant dense<0.000000e+00> : vector<16x32xf32>
    %230 = tpu.matmul %228, %229, %cst_64 {dimension_numbers = #tpu.dot_dimension_numbers<[1], [0], [0], [1], [0, 0, 1, 1], [], []>} : vector<16x32xf32>, vector<32x32xf32>, vector<16x32xf32> -> vector<16x32xf32>
    %231 = arith.addf %217, %230 : vector<16x32xf32>
    %cst_65 = arith.constant 0.000000e+00 : f32
    %232 = vector.broadcast %cst_65 : f32 to vector<16x32xf32>
    %233 = vector.extract_strided_slice %212 {offsets = [0, 2], sizes = [16, 1], strides = [1, 1]} : vector<16x4xf32> to vector<16x1xf32>
    %234 = vector.extract_strided_slice %93 {offsets = [0, 0], sizes = [16, 32], strides = [1, 1]} : vector<16x64xf32> to vector<16x32xf32>
    %235 = vector.broadcast %233 : vector<16x1xf32> to vector<16x32xf32>
    %236 = arith.mulf %235, %234 : vector<16x32xf32>
    %237 = arith.addf %232, %236 : vector<16x32xf32>
    %238 = vector.extract_strided_slice %212 {offsets = [0, 3], sizes = [16, 1], strides = [1, 1]} : vector<16x4xf32> to vector<16x1xf32>
    %239 = vector.extract_strided_slice %93 {offsets = [0, 32], sizes = [16, 32], strides = [1, 1]} : vector<16x64xf32> to vector<16x32xf32>
    %240 = vector.broadcast %238 : vector<16x1xf32> to vector<16x32xf32>
    %241 = arith.mulf %240, %239 : vector<16x32xf32>
    %242 = arith.addf %237, %241 : vector<16x32xf32>
    %243 = vector.extract_strided_slice %213 {offsets = [32, 0], sizes = [32, 32], strides = [1, 1]} : vector<64x32xf32> to vector<32x32xf32>
    %cst_66 = arith.constant dense<0.000000e+00> : vector<16x32xf32>
    %244 = tpu.matmul %242, %243, %cst_66 {dimension_numbers = #tpu.dot_dimension_numbers<[1], [0], [0], [1], [0, 0, 1, 1], [], []>} : vector<16x32xf32>, vector<32x32xf32>, vector<16x32xf32> -> vector<16x32xf32>
    %245 = arith.addf %231, %244 : vector<16x32xf32>
    %246 = arith.mulf %245, %63 : vector<16x32xf32>
    %247 = arith.mulf %246, %246 : vector<16x32xf32>
    %cst_67 = arith.constant dense<0.000000e+00> : vector<16xf32>
    %248 = vector.multi_reduction <add>, %247, %cst_67 [1] : vector<16x32xf32> to vector<16xf32>
    %249 = vector.shape_cast %248 : vector<16xf32> to vector<16x1xf32>
    %cst_68 = arith.constant 1.000000e-24 : f32
    %250 = vector.broadcast %cst_68 : f32 to vector<16x1xf32>
    %251 = arith.maximumf %249, %250 : vector<16x1xf32>
    %252 = math.rsqrt %251 : vector<16x1xf32>
    %253 = vector.broadcast %252 : vector<16x1xf32> to vector<16x32xf32>
    %254 = arith.mulf %246, %253 : vector<16x32xf32>
    %255 = tpu.iota {dimensions = array<i32: 0>} : vector<2x16xi32>
    %256 = vector.broadcast %3 : vector<1x16xi32> to vector<2x16xi32>
    %257 = arith.cmpi eq, %255, %256 : vector<2x16xi32>
    %258 = arith.extui %257 : vector<2x16xi1> to vector<2x16xi32>
    %259 = arith.sitofp %258 : vector<2x16xi32> to vector<2x16xf32>
    %cst_69 = arith.constant dense<0.000000e+00> : vector<2x32xf32>
    %260 = tpu.matmul %259, %254, %cst_69 {dimension_numbers = #tpu.dot_dimension_numbers<[1], [0], [0], [1], [0, 0, 1, 1], [], []>} : vector<2x16xf32>, vector<16x32xf32>, vector<2x32xf32> -> vector<2x32xf32>
    %c0_70 = arith.constant 0 : index
    %c0_71 = arith.constant 0 : index
    %261 = vector.load %arg5[%c0_70, %c0_71] : memref<2x32xf32, #tpu.memory_space<vmem>>, vector<2x32xf32>
    tpu.vector_store %arg5[%c0_70, %c0_71], %260 {strides = array<i32>} : memref<2x32xf32, #tpu.memory_space<vmem>>, vector<2x32xf32>,
    return
  }
}

</mosaic_0001>

<llo_original>
// kernel: weight_sum_forward.1
$region0: #{weight_sum_forward.1}
  #allocation0 [shape = 'u32[]', space=smem, size = 0x4, offset = 0x4, fixed_abs, tag = 'smem constant byte address 0x4 - core index']
  #allocation1 [shape = 'u32[72,128]{1,0:T(1,128)}', space=vmem, size = 0x9000, scoped, tag = 'internal scratch']
  %s0 = inlined_call_operand.vmem [shape: f32[64,24], index: 0, kind: input, shape index: {}]
  %s1 = inlined_call_operand.vmem [shape: s32[48,1], index: 1, kind: input, shape index: {}]
  %s2 = inlined_call_operand.vmem [shape: s32[1,48], index: 2, kind: input, shape index: {}]
  %s3 = inlined_call_operand.vmem [shape: f32[64,512], index: 3, kind: input, shape index: {}]
  %s4 = inlined_call_operand.hbm [shape: f32[1,896], index: 4, kind: input, shape index: {}]
  %s5 = inlined_call_operand.hbm [shape: f32[2,32], index: 5, kind: output, shape index: {}]
  %s6 = sld [smem:[#allocation0]]
  $region34: #{weight_sum_forward.1} parent=0
    _
  %s8 = ssub.s32 1, %s6
  %s9 = scalar_select 0, %s8, %s6
  $region1: #{weight_sum_forward.1} parent=0
    #allocation2 [shape = 'u8[3584]{0}', space=vmem, size = 0x1000, scoped, tag = 'input window, operand 4, single buffered']
    #allocation3 [shape = 's32[1]{0}', space=sflag, size = 0x4, scoped, tag = 'scoped memory for weight_sum_forward.1']
    #allocation4 [shape = 's32[1]{0}', space=sflag, size = 0x4, scoped, tag = 'scoped memory for weight_sum_forward.1']
    #allocation5 [shape = 'u8[1024]{0}', space=vmem, size = 0x400, scoped, tag = 'output window, operand 0, single buffered']
    %10 = vsyncpa [#allocation3], 0
    %11 = vsyncpa [#allocation4], 0
    // Predicated region
    $region2: #{weight_sum_forward.1} parent=1 // pred_check
      _
    $region3: #{weight_sum_forward.1} parent=1 // pred_check_branch
      %13 = sbr.rel (0) target = $region5
    $region4: #{weight_sum_forward.1} parent=1 // pred_region
      _
    $region5: #{weight_sum_forward.1} parent=1 // pred_fallthru
      _
    // Predicated region
    $region6: #{weight_sum_forward.1} parent=1 // pred_check
      _
    $region7: #{weight_sum_forward.1} parent=1 // pred_check_branch
      %15 = sbr.rel (0) target = $region9
    $region8: #{weight_sum_forward.1} parent=1 // pred_region
      _
    $region9: #{weight_sum_forward.1} parent=1 // pred_fallthru
      _
    // Predicated region
    $region10: #{weight_sum_forward.1} parent=1 // pred_check
      _
    $region11: #{weight_sum_forward.1} parent=1 // pred_check_branch
      %17 = sbr.rel (0) target = $region13
    $region12: #{weight_sum_forward.1} parent=1 // pred_region
      _
    $region13: #{weight_sum_forward.1} parent=1 // pred_fallthru
      _
    // Predicated region
    $region14: #{weight_sum_forward.1} parent=1 // pred_check
      _
    $region15: #{weight_sum_forward.1} parent=1 // pred_check_branch
      %19 = sbr.rel (0) target = $region17
    $region16: #{weight_sum_forward.1} parent=1 // pred_region
      _
    $region17: #{weight_sum_forward.1} parent=1 // pred_fallthru
      _
    // Predicated region
    $region18: #{weight_sum_forward.1} parent=1 // pred_check
      _
    $region19: #{weight_sum_forward.1} parent=1 // pred_check_branch
      %21 = sbr.rel (0) target = $region21
    $region20: #{weight_sum_forward.1} parent=1 // pred_region
      %23 = vsyncadd [#allocation3], 0
      %s25 = sshll.u32 %s4, 4
      %s26 = int_to_ptr.hbm [resolvable:$true] %s25
      %s27 = sshll.u32 [#allocation2], 4
      %s28 = int_to_ptr.vmem [resolvable:$true] %s27
      %30 = dma.hbm_to_vmem [thread:$0]  %s26, 112, %s28, [#allocation3]
    $region21: #{weight_sum_forward.1} parent=1 // pred_fallthru
      _
    // Predicated region
    $region22: #{weight_sum_forward.1} parent=1 // pred_check
      _
    $region23: #{weight_sum_forward.1} parent=1 // pred_check_branch
      %32 = sbr.rel (0) target = $region25
    $region24: #{weight_sum_forward.1} parent=1 // pred_region
      %34 = dma.done [#allocation3], 112
    $region25: #{weight_sum_forward.1} parent=1 // pred_fallthru
      _
    %v35 = vld [vmem:[%s1] sm:$0xff]
    %v36 = vld [vmem:[%s1 + $0x8] sm:$0xff]
    %v37 = vld [vmem:[%s1 + $0x10] sm:$0xff]
    %v38 = vld [vmem:[%s1 + $0x18] sm:$0xff]
    %v39 = vld [vmem:[%s1 + $0x20] sm:$0xff]
    %v40 = vld [vmem:[%s1 + $0x28] sm:$0xff]
    %v41 = vld [vmem:[%s2] sm:$0x1]
    %v42 = vld [vmem:[%s0] sm:$0xff]
    %v43 = vld [vmem:[%s0 + $0x8] sm:$0xff]
    %v44 = vld [vmem:[%s0 + $0x10] sm:$0xff]
    %v45 = vld [vmem:[%s0 + $0x18] sm:$0xff]
    %v46 = vld [vmem:[%s0 + $0x20] sm:$0xff]
    %v47 = vld [vmem:[%s0 + $0x28] sm:$0xff]
    %v48 = vld [vmem:[%s0 + $0x30] sm:$0xff]
    %v49 = vld [vmem:[%s0 + $0x38] sm:$0xff]
    %v50 = vld [vmem:[%s3] sm:$0xff]
    %v51 = vld [vmem:[%s3 + $0x20] sm:$0xff]
    %v52 = vld [vmem:[%s3 + $0x40] sm:$0xff]
    %vm53 = vcmask 195584
    %v55 = vsel %vm53, %v42, 0
    %v58 = vsel %vm53, %v43, 0
    %v61 = vsel %vm53, %v44, 0
    %v64 = vsel %vm53, %v45, 0
    %v67 = vsel %vm53, %v46, 0
    %v70 = vsel %vm53, %v47, 0
    %v73 = vsel %vm53, %v48, 0
    %v76 = vsel %vm53, %v49, 0
    %78 = vmatpush.msra.mxu0 0.0
    %79 = vmatpush.msra.mxu0 0.0
    %80 = vmatpush.msra.mxu0 0.0
    %81 = vmatpush.msra.mxu0 0.0
    %82 = vmatpush.msra.mxu0 0.0
    %83 = vmatpush.msra.mxu0 0.0
    %84 = vmatpush.msra.mxu0 0.0
    %85 = vmatpush.msra.mxu0 0.0
    %86 = vmatpush.msra.mxu0 0.0
    %87 = vmatpush.msra.mxu0 0.0
    %88 = vmatpush.msra.mxu0 0.0
    %89 = vmatpush.msra.mxu0 0.0
    %90 = vmatpush.msra.mxu0 0.0
    %91 = vmatpush.msra.mxu0 %v52
    %92 = vmatpush.msra.mxu0 %v51
    %93 = vmatpush.msra.mxu0 %v50
    %94 = vmatmul.f32.gmra.mxu0 %v55
    %v95 = vpop.f32.mrf.mxu0
    %v96 = vadd.f32 0.0, %v95
    %97 = vmatmul.f32.gmra.mxu0 %v58
    %v98 = vpop.f32.mrf.mxu0
    %v99 = vadd.f32 0.0, %v98
    %100 = vmatmul.f32.gmra.mxu0 %v61
    %v101 = vpop.f32.mrf.mxu0
    %v102 = vadd.f32 0.0, %v101
    %103 = vmatmul.f32.gmra.mxu0 %v64
    %v104 = vpop.f32.mrf.mxu0
    %v105 = vadd.f32 0.0, %v104
    %106 = vmatmul.f32.gmra.mxu0 %v67
    %v107 = vpop.f32.mrf.mxu0
    %v108 = vadd.f32 0.0, %v107
    %109 = vmatmul.f32.gmra.mxu0 %v70
    %v110 = vpop.f32.mrf.mxu0
    %v111 = vadd.f32 0.0, %v110
    %112 = vmatmul.f32.gmra.mxu0 %v73
    %v113 = vpop.f32.mrf.mxu0
    %v114 = vadd.f32 0.0, %v113
    %115 = vmatmul.f32.gmra.mxu0 %v76
    %v116 = vpop.f32.mrf.mxu0
    %v117 = vadd.f32 0.0, %v116
    %118 = vdwg.mxu0
    %v119 = vld [vmem:[#allocation2] sm:$0x1]
    %v121 = vperm.slane %v119, 0
    %v123 = vadd.f32 %v96, %v121
    %v124 = vadd.f32 %v99, %v121
    %v125 = vld [vmem:[#allocation2 + $0x1] sm:$0x1]
    %v127 = vperm.slane %v125, 0
    %128 = vrot.lane.b32.xlu0 %v127, 32
    %v129 = vpop.permute.xlu0 %128
    %v131 = vadd.f32 %v102, %v129
    %v132 = vadd.f32 %v105, %v129
    %v133 = vadd.f32 %v108, %v129
    %v134 = vadd.f32 %v111, %v129
    %v135 = vlaneseq
    %v136 = vand.u32 %v135, 127
    %137 = vset.pattern.permute.xlu0 0
    %138 = vperm.xlu0 %137, %v35
    %v139 = vpop.permute.xlu0 %138
    %140 = vset.pattern.permute.xlu0 0
    %141 = vperm.xlu0 %140, %v36
    %v142 = vpop.permute.xlu0 %141
    %143 = vset.pattern.permute.xlu0 0
    %144 = vperm.xlu0 %143, %v37
    %v145 = vpop.permute.xlu0 %144
    %146 = vset.pattern.permute.xlu0 0
    %147 = vperm.xlu0 %146, %v38
    %v148 = vpop.permute.xlu0 %147
    %vm149 = vcmp.eq.s32.totalorder %v136, %v139
    %vm150 = vcmp.eq.s32.totalorder %v136, %v142
    %vm151 = vcmp.eq.s32.totalorder %v136, %v145
    %vm152 = vcmp.eq.s32.totalorder %v136, %v148
    %v153 = vsel %vm149, 1, 0
    %v154 = vsel %vm150, 1, 0
    %v155 = vsel %vm151, 1, 0
    %v156 = vsel %vm152, 1, 0
    %v157 = vcvt.s32.f32 %v153
    %v158 = vcvt.s32.f32 %v154
    %v159 = vcvt.s32.f32 %v155
    %v160 = vcvt.s32.f32 %v156
    %v161 = vlaneseq
    %v162 = vshrl.u32 %v161, 7
    %v163 = vadd.s32 %v162, 8
    %v164 = vperm.slane %v41, 0
    %vm165 = vcmp.eq.s32.totalorder %v162, %v164
    %vm166 = vcmp.eq.s32.totalorder %v163, %v164
    %v167 = vsel %vm165, 1, 0
    %v168 = vsel %vm166, 1, 0
    %v169 = vcvt.s32.f32 %v167
    %v170 = vcvt.s32.f32 %v168
    %vm171 = vcmask 130048
    %v173 = vsel %vm171, %v157, 0
    %v176 = vsel %vm171, %v158, 0
    %v179 = vsel %vm171, %v159, 0
    %v182 = vsel %vm171, %v160, 0
    %184 = vmatpush.msra.mxu0 0.0
    %185 = vmatpush.msra.mxu0 0.0
    %186 = vmatpush.msra.mxu0 0.0
    %187 = vmatpush.msra.mxu0 0.0
    %188 = vmatpush.msra.mxu0 0.0
    %189 = vmatpush.msra.mxu0 0.0
    %190 = vmatpush.msra.mxu0 0.0
    %191 = vmatpush.msra.mxu0 0.0
    %192 = vmatpush.msra.mxu0 0.0
    %193 = vmatpush.msra.mxu0 0.0
    %194 = vmatpush.msra.mxu0 0.0
    %195 = vmatpush.msra.mxu0 0.0
    %196 = vmatpush.msra.mxu0 0.0
    %197 = vmatpush.msra.mxu0 0.0
    %198 = vmatpush.msra.mxu0 %v124
    %199 = vmatpush.msra.mxu0 %v123
    %200 = vmatmul.f32.gmra.mxu0 %v173
    %v201 = vpop.f32.mrf.mxu0
    %v202 = vadd.f32 0.0, %v201
    %203 = vmatmul.f32.gmra.mxu0 %v176
    %v204 = vpop.f32.mrf.mxu0
    %v205 = vadd.f32 0.0, %v204
    %206 = vmatmul.f32.gmra.mxu0 %v179
    %v207 = vpop.f32.mrf.mxu0
    %v208 = vadd.f32 0.0, %v207
    %209 = vmatmul.f32.gmra.mxu0 %v182
    %v210 = vpop.f32.mrf.mxu0
    %v211 = vadd.f32 0.0, %v210
    %212 = vdwg.mxu0
    %217 = vrot.lane.b32.xlu0 %v131, 96
    %v218 = vpop.permute.xlu0 %217
    %219 = vrot.lane.b32.xlu0 %v132, 96
    %v220 = vpop.permute.xlu0 %219
    %221 = vrot.lane.b32.xlu0 %v133, 96
    %v222 = vpop.permute.xlu0 %221
    %223 = vrot.lane.b32.xlu0 %v134, 96
    %v224 = vpop.permute.xlu0 %223
    %v229 = vmul.f32 %v202, %v218
    %v230 = vmul.f32 %v205, %v220
    %v231 = vmul.f32 %v208, %v222
    %v232 = vmul.f32 %v211, %v224
    %vm233 = vcmask 261120
    %v234 = vsel %vm233, %v229, 0.0
    %235 = vadd.xlane.f32.xlu0 %v234
    %v236 = vpop.xlane.xlu0 %235
    %v237 = vsel %vm233, %v230, 0.0
    %238 = vadd.xlane.f32.xlu0 %v237
    %v239 = vpop.xlane.xlu0 %238
    %v240 = vsel %vm233, %v231, 0.0
    %241 = vadd.xlane.f32.xlu0 %v240
    %v242 = vpop.xlane.xlu0 %241
    %v243 = vsel %vm233, %v232, 0.0
    %244 = vadd.xlane.f32.xlu0 %v243
    %v245 = vpop.xlane.xlu0 %244
    %v246 = vsel %vm149, %v236, -1e+30
    %v247 = vsel %vm150, %v239, -1e+30
    %v248 = vsel %vm151, %v242, -1e+30
    %v249 = vsel %vm152, %v245, -1e+30
    %v250 = vsel %vm171, %v246, -inf
    %v251 = vsel %vm171, %v247, -inf
    %v252 = vsel %vm171, %v248, -inf
    %v253 = vsel %vm171, %v249, -inf
    %v254 = vmax.f32 %v250, %v251
    %v255 = vmax.f32 %v252, %v253
    %v256 = vmax.f32 %v254, %v255
    %v257 = vrot.slane %v256, 4
    %v258 = vmax.f32 %v256, %v257
    %v259 = vrot.slane %v258, 2
    %v260 = vmax.f32 %v258, %v259
    %v261 = vrot.slane %v260, 1
    %v262 = vmax.f32 %v260, %v261
    %v263 = vmul.f32 %v157, %v262
    %v264 = vmul.f32 %v158, %v262
    %v265 = vmul.f32 %v159, %v262
    %v266 = vmul.f32 %v160, %v262
    %v267 = vsel %vm171, %v263, 0.0
    %268 = vadd.xlane.f32.xlu0 %v267
    %v269 = vpop.xlane.xlu0 %268
    %v270 = vsel %vm171, %v264, 0.0
    %271 = vadd.xlane.f32.xlu0 %v270
    %v272 = vpop.xlane.xlu0 %271
    %v273 = vsel %vm171, %v265, 0.0
    %274 = vadd.xlane.f32.xlu0 %v273
    %v275 = vpop.xlane.xlu0 %274
    %v276 = vsel %vm171, %v266, 0.0
    %277 = vadd.xlane.f32.xlu0 %v276
    %v278 = vpop.xlane.xlu0 %277
    %v279 = vsub.f32 %v236, %v269
    %v280 = vsub.f32 %v239, %v272
    %v281 = vsub.f32 %v242, %v275
    %v282 = vsub.f32 %v245, %v278
    %v283 = vmul.f32 %v279, 1.442695
    %v284 = vpow.pop %v283
    %v285 = vmul.f32 %v280, 1.442695
    %v286 = vpow.pop %v285
    %v287 = vmul.f32 %v281, 1.442695
    %v288 = vpow.pop %v287
    %v289 = vmul.f32 %v282, 1.442695
    %v290 = vpow.pop %v289
    %v291 = vmul.f32 %v157, %v284
    %v292 = vmul.f32 %v158, %v286
    %v293 = vmul.f32 %v159, %v288
    %v294 = vmul.f32 %v160, %v290
    %v295 = vsel %vm171, %v291, 0.0
    %v296 = vsel %vm171, %v292, 0.0
    %v297 = vadd.f32 %v295, %v296
    %v298 = vsel %vm171, %v293, 0.0
    %v299 = vadd.f32 %v297, %v298
    %v300 = vsel %vm171, %v294, 0.0
    %v301 = vadd.f32 %v299, %v300
    %v302 = vrot.slane %v301, 4
    %v303 = vadd.f32 %v301, %v302
    %v304 = vrot.slane %v303, 2
    %v305 = vadd.f32 %v303, %v304
    %v306 = vrot.slane %v305, 1
    %v307 = vadd.f32 %v305, %v306
    %v308 = vmul.f32 %v157, %v307
    %v309 = vmul.f32 %v158, %v307
    %v310 = vmul.f32 %v159, %v307
    %v311 = vmul.f32 %v160, %v307
    %v312 = vsel %vm171, %v308, 0.0
    %313 = vadd.xlane.f32.xlu0 %v312
    %v314 = vpop.xlane.xlu0 %313
    %v315 = vsel %vm171, %v309, 0.0
    %316 = vadd.xlane.f32.xlu0 %v315
    %v317 = vpop.xlane.xlu0 %316
    %v318 = vsel %vm171, %v310, 0.0
    %319 = vadd.xlane.f32.xlu0 %v318
    %v320 = vpop.xlane.xlu0 %319
    %v321 = vsel %vm171, %v311, 0.0
    %322 = vadd.xlane.f32.xlu0 %v321
    %v323 = vpop.xlane.xlu0 %322
    %v324 = vadd.f32 %v314, 1e-16
    %v325 = vadd.f32 %v317, 1e-16
    %v326 = vadd.f32 %v320, 1e-16
    %v327 = vadd.f32 %v323, 1e-16
    %v328 = vrcp.pop %v324
    %v329 = vmul.f32 %v324, %v328
    %v330 = vsub.f32 1.0, %v329
    %v331 = vmul.f32 %v328, %v330
    %v332 = vadd.f32 %v328, %v331
    %vm333 = vweird.f32 %v324
    %vm334 = vweird.f32 %v328
    %vm335 = vmor %vm333, %vm334
    %v336 = vsel %vm335, %v328, %v332
    %v337 = vand.u32 2147483647, %v324
    %vm338 = vcmp.eq.f32.partialorder %v337, 8.507059e+37
    %v339 = vand.u32 %v324, 2147483648
    %v340 = vor.u32 1.1754944e-38, %v339
    %v341 = vsel %vm338, %v340, %v336
    %v342 = vmul.f32 %v284, %v341
    %v343 = vrcp.pop %v325
    %v344 = vmul.f32 %v325, %v343
    %v345 = vsub.f32 1.0, %v344
    %v346 = vmul.f32 %v343, %v345
    %v347 = vadd.f32 %v343, %v346
    %vm348 = vweird.f32 %v325
    %vm349 = vweird.f32 %v343
    %vm350 = vmor %vm348, %vm349
    %v351 = vsel %vm350, %v343, %v347
    %v352 = vand.u32 2147483647, %v325
    %vm353 = vcmp.eq.f32.partialorder %v352, 8.507059e+37
    %v354 = vand.u32 %v325, 2147483648
    %v355 = vor.u32 1.1754944e-38, %v354
    %v356 = vsel %vm353, %v355, %v351
    %v357 = vmul.f32 %v286, %v356
    %v358 = vrcp.pop %v326
    %v359 = vmul.f32 %v326, %v358
    %v360 = vsub.f32 1.0, %v359
    %v361 = vmul.f32 %v358, %v360
    %v362 = vadd.f32 %v358, %v361
    %vm363 = vweird.f32 %v326
    %vm364 = vweird.f32 %v358
    %vm365 = vmor %vm363, %vm364
    %v366 = vsel %vm365, %v358, %v362
    %v367 = vand.u32 2147483647, %v326
    %vm368 = vcmp.eq.f32.partialorder %v367, 8.507059e+37
    %v369 = vand.u32 %v326, 2147483648
    %v370 = vor.u32 1.1754944e-38, %v369
    %v371 = vsel %vm368, %v370, %v366
    %v372 = vmul.f32 %v288, %v371
    %v373 = vrcp.pop %v327
    %v374 = vmul.f32 %v327, %v373
    %v375 = vsub.f32 1.0, %v374
    %v376 = vmul.f32 %v373, %v375
    %v377 = vadd.f32 %v373, %v376
    %vm378 = vweird.f32 %v327
    %vm379 = vweird.f32 %v373
    %vm380 = vmor %vm378, %vm379
    %v381 = vsel %vm380, %v373, %v377
    %v382 = vand.u32 2147483647, %v327
    %vm383 = vcmp.eq.f32.partialorder %v382, 8.507059e+37
    %v384 = vand.u32 %v327, 2147483648
    %v385 = vor.u32 1.1754944e-38, %v384
    %v386 = vsel %vm383, %v385, %v381
    %v387 = vmul.f32 %v290, %v386
    %v388 = vmul.f32 %v342, %v202
    %v389 = vmul.f32 %v357, %v205
    %v390 = vmul.f32 %v372, %v208
    %v391 = vmul.f32 %v387, %v211
    %v393 = vsel %vm233, %v169, 0
    %v396 = vsel %vm233, %v170, 0
    %398 = vmatpush.msra.mxu0 0.0
    %399 = vmatpush.msra.mxu0 0.0
    %400 = vmatpush.msra.mxu0 0.0
    %401 = vmatpush.msra.mxu0 0.0
    %402 = vmatpush.msra.mxu0 0.0
    %403 = vmatpush.msra.mxu0 0.0
    %404 = vmatpush.msra.mxu0 0.0
    %405 = vmatpush.msra.mxu0 0.0
    %406 = vmatpush.msra.mxu0 0.0
    %407 = vmatpush.msra.mxu0 0.0
    %408 = vmatpush.msra.mxu0 0.0
    %409 = vmatpush.msra.mxu0 0.0
    %410 = vmatpush.msra.mxu0 %v391
    %411 = vmatpush.msra.mxu0 %v390
    %412 = vmatpush.msra.mxu0 %v389
    %413 = vmatpush.msra.mxu0 %v388
    %414 = vmatmul.f32.gmra.mxu0 %v393
    %v415 = vpop.f32.mrf.mxu0
    %v416 = vadd.f32 0.0, %v415
    %417 = vmatmul.f32.gmra.mxu0 %v396
    %v418 = vpop.f32.mrf.mxu0
    %v419 = vadd.f32 0.0, %v418
    %420 = vdwg.mxu0
    %v421 = vmul.f32 %v416, %v416
    %v422 = vmul.f32 %v419, %v419
    %v423 = vsel %vm233, %v421, 0.0
    %424 = vadd.xlane.f32.xlu0 %v423
    %v425 = vpop.xlane.xlu0 %424
    %v426 = vsel %vm233, %v422, 0.0
    %427 = vadd.xlane.f32.xlu0 %v426
    %v428 = vpop.xlane.xlu0 %427
    %v429 = vmax.f32 %v425, 1e-24
    %v430 = vmax.f32 %v428, 1e-24
    %v431 = vrsqrt.pop %v429
    %v432 = vmul.f32 %v431, %v429
    %v433 = vmul.f32 %v432, %v431
    %v434 = vmul.f32 0.5, %v433
    %v435 = vsub.f32 1.5, %v434
    %v436 = vmul.f32 %v431, %v435
    %vm437 = vweird.f32 %v429
    %vm438 = vweird.f32 %v431
    %vm439 = vmor %vm437, %vm438
    %v440 = vsel %vm439, %v431, %v436
    %v441 = vrsqrt.pop %v430
    %v442 = vmul.f32 %v441, %v430
    %v443 = vmul.f32 %v442, %v441
    %v444 = vmul.f32 0.5, %v443
    %v445 = vsub.f32 1.5, %v444
    %v446 = vmul.f32 %v441, %v445
    %vm447 = vweird.f32 %v430
    %vm448 = vweird.f32 %v441
    %vm449 = vmor %vm447, %vm448
    %v450 = vsel %vm449, %v441, %v446
    %v451 = vmul.f32 %v416, %v440
    %v452 = vmul.f32 %v419, %v450
    %vm453 = vcmask 605696
    %v454 = vsel %vm453, %v114, 0.0
    %v455 = vsel %vm453, %v117, 0.0
    %v456 = vadd.f32 %v454, %v455
    %v457 = vrot.slane %v456, 4
    %v458 = vadd.f32 %v456, %v457
    %v459 = vrot.slane %v458, 2
    %v460 = vadd.f32 %v458, %v459
    %v461 = vrot.slane %v460, 1
    %v462 = vadd.f32 %v460, %v461
    %v463 = vmul.f32 %v462, 0.0625
    %v464 = vsub.f32 %v114, %v463
    %v465 = vsub.f32 %v117, %v463
    %v466 = vmul.f32 %v464, %v464
    %v467 = vmul.f32 %v465, %v465
    %v468 = vsel %vm453, %v466, 0.0
    %v469 = vsel %vm453, %v467, 0.0
    %v470 = vadd.f32 %v468, %v469
    %v471 = vrot.slane %v470, 4
    %v472 = vadd.f32 %v470, %v471
    %v473 = vrot.slane %v472, 2
    %v474 = vadd.f32 %v472, %v473
    %v475 = vrot.slane %v474, 1
    %v476 = vadd.f32 %v474, %v475
    %v477 = vmul.f32 %v476, 0.0625
    %v478 = vadd.f32 %v477, 1e-05
    %v479 = vrsqrt.pop %v478
    %v480 = vmul.f32 %v479, %v478
    %v481 = vmul.f32 %v480, %v479
    %v482 = vmul.f32 0.5, %v481
    %v483 = vsub.f32 1.5, %v482
    %v484 = vmul.f32 %v479, %v483
    %vm485 = vweird.f32 %v478
    %vm486 = vweird.f32 %v479
    %vm487 = vmor %vm485, %vm486
    %v488 = vsel %vm487, %v479, %v484
    %v489 = vmul.f32 %v464, %v488
    %v490 = vmul.f32 %v465, %v488
    %v491 = vld [vmem:[#allocation2 + $0x2] sm:$0x1]
    %v493 = vperm.slane %v491, 0
    %494 = vrot.lane.b32.xlu0 %v493, 64
    %v495 = vpop.permute.xlu0 %494
    %v497 = vmul.f32 %v489, %v495
    %v498 = vmul.f32 %v490, %v495
    %v499 = vld [vmem:[#allocation2 + $0x3] sm:$0x1]
    %v501 = vperm.slane %v499, 0
    %502 = vrot.lane.b32.xlu0 %v501, 64
    %v503 = vpop.permute.xlu0 %502
    %v505 = vadd.f32 %v497, %v503
    %v506 = vadd.f32 %v498, %v503
    %v507 = vld [vmem:[%s3 + $0x8] sm:$0xff]
    %v508 = vld [vmem:[%s3 + $0x10] sm:$0xff]
    %v509 = vld [vmem:[%s3 + $0x28] sm:$0x3]
    %v510 = vld [vmem:[%s3 + $0x30] sm:$0x3]
    %v511 = vld [vmem:[#allocation2 + $0x4] sm:$0x3]
    %v513 = vperm.slane %v511, 0
    %v514 = vperm.slane %v511, 1
    %519 = vrot.lane.b32.xlu0 %v505, 64
    %v520 = vpop.permute.xlu0 %519
    %521 = vrot.lane.b32.xlu0 %v506, 64
    %v522 = vpop.permute.xlu0 %521
    %vm523 = vcmask 80896
    %v524 = vsel %vm523, %v520, 0
    %v526 = vsel %vm523, %v522, 0
    %vm528 = vcmask 1041408
    %v530 = vsel %vm528, %v509, 0
    %v533 = vsel %vm528, %v510, 0
    %535 = vmatpush.msra.mxu0 0.0
    %536 = vmatpush.msra.mxu0 0.0
    %537 = vmatpush.msra.mxu0 0.0
    %538 = vmatpush.msra.mxu0 0.0
    %539 = vmatpush.msra.mxu0 0.0
    %540 = vmatpush.msra.mxu0 0.0
    %541 = vmatpush.msra.mxu0 0.0
    %542 = vmatpush.msra.mxu0 0.0
    %543 = vmatpush.msra.mxu0 0.0
    %544 = vmatpush.msra.mxu0 0.0
    %545 = vmatpush.msra.mxu0 0.0
    %546 = vmatpush.msra.mxu0 0.0
    %547 = vmatpush.msra.mxu0 0.0
    %548 = vmatpush.msra.mxu0 0.0
    %549 = vmatpush.msra.mxu0 %v530
    %550 = vmatpush.msra.mxu0 %v507
    %551 = vmatmul.f32.gmra.mxu0 %v524
    %v552 = vpop.f32.mrf.mxu0
    %v553 = vadd.f32 %v513, %v552
    %554 = vmatmul.f32.gmra.mxu0 %v526
    %v555 = vpop.f32.mrf.mxu0
    %v556 = vadd.f32 %v513, %v555
    %557 = vdwg.mxu0
    %558 = vmatpush.msra.mxu0 0.0
    %559 = vmatpush.msra.mxu0 0.0
    %560 = vmatpush.msra.mxu0 0.0
    %561 = vmatpush.msra.mxu0 0.0
    %562 = vmatpush.msra.mxu0 0.0
    %563 = vmatpush.msra.mxu0 0.0
    %564 = vmatpush.msra.mxu0 0.0
    %565 = vmatpush.msra.mxu0 0.0
    %566 = vmatpush.msra.mxu0 0.0
    %567 = vmatpush.msra.mxu0 0.0
    %568 = vmatpush.msra.mxu0 0.0
    %569 = vmatpush.msra.mxu0 0.0
    %570 = vmatpush.msra.mxu0 0.0
    %571 = vmatpush.msra.mxu0 0.0
    %572 = vmatpush.msra.mxu0 %v533
    %573 = vmatpush.msra.mxu0 %v508
    %574 = vmatmul.f32.gmra.mxu0 %v524
    %v575 = vpop.f32.mrf.mxu0
    %v576 = vadd.f32 %v514, %v575
    %577 = vmatmul.f32.gmra.mxu0 %v526
    %v578 = vpop.f32.mrf.mxu0
    %v579 = vadd.f32 %v514, %v578
    %580 = vdwg.mxu0
    %583 = vrot.lane.b32.xlu0 %v553, 64
    %v584 = vpop.permute.xlu0 %583
    %585 = vrot.lane.b32.xlu0 %v556, 64
    %v586 = vpop.permute.xlu0 %585
    %v589 = vmul.f32 %v553, %v584
    %v590 = vmul.f32 %v556, %v586
    %v591 = vsel %vm233, %v589, 0.0
    %592 = vadd.xlane.f32.xlu0 %v591
    %v593 = vpop.xlane.xlu0 %592
    %v594 = vsel %vm233, %v590, 0.0
    %595 = vadd.xlane.f32.xlu0 %v594
    %v596 = vpop.xlane.xlu0 %595
    %v597 = vmul.f32 %v593, 0.17677669
    %v598 = vmul.f32 %v596, 0.17677669
    %vm599 = vcmp.eq.s32.totalorder %v136, 0
    %v600 = vsel %vm599, 1, 0
    %v601 = vcvt.s32.f32 %v600
    %v602 = vmul.f32 %v597, %v601
    %v603 = vmul.f32 %v598, %v601
    %v604 = vadd.f32 %v602, 0.0
    %v605 = vadd.f32 %v603, 0.0
    %606 = vrot.lane.b32.xlu0 %v553, 32
    %v607 = vpop.permute.xlu0 %606
    %608 = vrot.lane.b32.xlu0 %v556, 32
    %v609 = vpop.permute.xlu0 %608
    %v612 = vmul.f32 %v553, %v607
    %v613 = vmul.f32 %v556, %v609
    %v614 = vsel %vm233, %v612, 0.0
    %615 = vadd.xlane.f32.xlu0 %v614
    %v616 = vpop.xlane.xlu0 %615
    %v617 = vsel %vm233, %v613, 0.0
    %618 = vadd.xlane.f32.xlu0 %v617
    %v619 = vpop.xlane.xlu0 %618
    %v620 = vmul.f32 %v616, 0.17677669
    %v621 = vmul.f32 %v619, 0.17677669
    %vm622 = vcmp.eq.s32.totalorder %v136, 1
    %v623 = vsel %vm622, 1, 0
    %v624 = vcvt.s32.f32 %v623
    %v625 = vmul.f32 %v620, %v624
    %v626 = vmul.f32 %v621, %v624
    %v627 = vadd.f32 %v604, %v625
    %v628 = vadd.f32 %v605, %v626
    %629 = vrot.lane.b32.xlu0 %v553, 96
    %v630 = vpop.permute.xlu0 %629
    %631 = vrot.lane.b32.xlu0 %v556, 96
    %v632 = vpop.permute.xlu0 %631
    %v635 = vmul.f32 %v553, %v630
    %v636 = vmul.f32 %v556, %v632
    %639 = vrot.lane.b32.xlu0 %v635, 96
    %v640 = vpop.permute.xlu0 %639
    %641 = vrot.lane.b32.xlu0 %v636, 96
    %v642 = vpop.permute.xlu0 %641
    %v645 = vsel %vm233, %v640, 0.0
    %646 = vadd.xlane.f32.xlu0 %v645
    %v647 = vpop.xlane.xlu0 %646
    %v648 = vsel %vm233, %v642, 0.0
    %649 = vadd.xlane.f32.xlu0 %v648
    %v650 = vpop.xlane.xlu0 %649
    %v651 = vmul.f32 %v647, 0.17677669
    %v652 = vmul.f32 %v650, 0.17677669
    %vm653 = vcmp.eq.s32.totalorder %v136, 2
    %v654 = vsel %vm653, 1, 0
    %v655 = vcvt.s32.f32 %v654
    %v656 = vmul.f32 %v651, %v655
    %v657 = vmul.f32 %v652, %v655
    %v658 = vadd.f32 %v627, %v656
    %v659 = vadd.f32 %v628, %v657
    %662 = vrot.lane.b32.xlu0 %v589, 96
    %v663 = vpop.permute.xlu0 %662
    %664 = vrot.lane.b32.xlu0 %v590, 96
    %v665 = vpop.permute.xlu0 %664
    %v668 = vsel %vm233, %v663, 0.0
    %669 = vadd.xlane.f32.xlu0 %v668
    %v670 = vpop.xlane.xlu0 %669
    %v671 = vsel %vm233, %v665, 0.0
    %672 = vadd.xlane.f32.xlu0 %v671
    %v673 = vpop.xlane.xlu0 %672
    %v674 = vmul.f32 %v670, 0.17677669
    %v675 = vmul.f32 %v673, 0.17677669
    %vm676 = vcmp.eq.s32.totalorder %v136, 3
    %v677 = vsel %vm676, 1, 0
    %v678 = vcvt.s32.f32 %v677
    %v679 = vmul.f32 %v674, %v678
    %v680 = vmul.f32 %v675, %v678
    %v681 = vadd.f32 %v658, %v679
    %v682 = vadd.f32 %v659, %v680
    %vm683 = vcmp.eq.s32.totalorder %v39, 0
    %vm684 = vcmp.eq.s32.totalorder %v40, 0
    %v685 = vsel %vm683, 1, 0
    %v686 = vsel %vm684, 1, 0
    %687 = vset.pattern.permute.xlu0 0
    %688 = vperm.xlu0 %687, %v685
    %v689 = vpop.permute.xlu0 %688
    %690 = vset.pattern.permute.xlu0 0
    %691 = vperm.xlu0 %690, %v686
    %v692 = vpop.permute.xlu0 %691
    %vm693 = vcmp.eq.s32.totalorder %v689, 1
    %vm694 = vcmp.eq.s32.totalorder %v692, 1
    %v695 = vsel %vm693, %v681, -1e+30
    %v696 = vsel %vm694, %v682, -1e+30
    %vm697 = vcmask 31744
    %v698 = vsel %vm697, %v695, -inf
    %v699 = vsel %vm697, %v696, -inf
    %v700 = vmax.f32 %v698, %v699
    %v701 = vrot.slane %v700, 4
    %v702 = vmax.f32 %v700, %v701
    %v703 = vrot.slane %v702, 2
    %v704 = vmax.f32 %v702, %v703
    %v705 = vrot.slane %v704, 1
    %v706 = vmax.f32 %v704, %v705
    %v707 = vsel %vm693, %v706, -1e+30
    %v708 = vsel %vm694, %v706, -1e+30
    %vm709 = vcmp.eq.s32.totalorder %v39, 1
    %vm710 = vcmp.eq.s32.totalorder %v40, 1
    %v711 = vsel %vm709, 1, 0
    %v712 = vsel %vm710, 1, 0
    %713 = vset.pattern.permute.xlu0 0
    %714 = vperm.xlu0 %713, %v711
    %v715 = vpop.permute.xlu0 %714
    %716 = vset.pattern.permute.xlu0 0
    %717 = vperm.xlu0 %716, %v712
    %v718 = vpop.permute.xlu0 %717
    %vm719 = vcmp.eq.s32.totalorder %v715, 1
    %vm720 = vcmp.eq.s32.totalorder %v718, 1
    %v721 = vsel %vm719, %v681, -1e+30
    %v722 = vsel %vm720, %v682, -1e+30
    %v723 = vsel %vm697, %v721, -inf
    %v724 = vsel %vm697, %v722, -inf
    %v725 = vmax.f32 %v723, %v724
    %v726 = vrot.slane %v725, 4
    %v727 = vmax.f32 %v725, %v726
    %v728 = vrot.slane %v727, 2
    %v729 = vmax.f32 %v727, %v728
    %v730 = vrot.slane %v729, 1
    %v731 = vmax.f32 %v729, %v730
    %v732 = vsel %vm719, %v731, %v707
    %v733 = vsel %vm720, %v731, %v708
    %v734 = vsub.f32 %v681, %v732
    %v735 = vsub.f32 %v682, %v733
    %v736 = vmul.f32 %v734, 1.442695
    %v737 = vpow.pop %v736
    %v738 = vmul.f32 %v735, 1.442695
    %v739 = vpow.pop %v738
    %v740 = vsel %vm693, %v737, 0.0
    %v741 = vsel %vm694, %v739, 0.0
    %v742 = vsel %vm697, %v740, 0.0
    %v743 = vsel %vm697, %v741, 0.0
    %v744 = vadd.f32 %v742, %v743
    %v745 = vrot.slane %v744, 4
    %v746 = vadd.f32 %v744, %v745
    %v747 = vrot.slane %v746, 2
    %v748 = vadd.f32 %v746, %v747
    %v749 = vrot.slane %v748, 1
    %v750 = vadd.f32 %v748, %v749
    %v751 = vsel %vm693, %v750, 0.0
    %v752 = vsel %vm694, %v750, 0.0
    %v753 = vsel %vm719, %v737, 0.0
    %v754 = vsel %vm720, %v739, 0.0
    %v755 = vsel %vm697, %v753, 0.0
    %v756 = vsel %vm697, %v754, 0.0
    %v757 = vadd.f32 %v755, %v756
    %v758 = vrot.slane %v757, 4
    %v759 = vadd.f32 %v757, %v758
    %v760 = vrot.slane %v759, 2
    %v761 = vadd.f32 %v759, %v760
    %v762 = vrot.slane %v761, 1
    %v763 = vadd.f32 %v761, %v762
    %v764 = vsel %vm719, %v763, %v751
    %v765 = vsel %vm720, %v763, %v752
    %v766 = vadd.f32 %v764, 1e-16
    %v767 = vadd.f32 %v765, 1e-16
    %v768 = vrcp.pop %v766
    %v769 = vmul.f32 %v766, %v768
    %v770 = vsub.f32 1.0, %v769
    %v771 = vmul.f32 %v768, %v770
    %v772 = vadd.f32 %v768, %v771
    %vm773 = vweird.f32 %v766
    %vm774 = vweird.f32 %v768
    %vm775 = vmor %vm773, %vm774
    %v776 = vsel %vm775, %v768, %v772
    %v777 = vand.u32 2147483647, %v766
    %vm778 = vcmp.eq.f32.partialorder %v777, 8.507059e+37
    %v779 = vand.u32 %v766, 2147483648
    %v780 = vor.u32 1.1754944e-38, %v779
    %v781 = vsel %vm778, %v780, %v776
    %v782 = vmul.f32 %v737, %v781
    %v783 = vrcp.pop %v767
    %v784 = vmul.f32 %v767, %v783
    %v785 = vsub.f32 1.0, %v784
    %v786 = vmul.f32 %v783, %v785
    %v787 = vadd.f32 %v783, %v786
    %vm788 = vweird.f32 %v767
    %vm789 = vweird.f32 %v783
    %vm790 = vmor %vm788, %vm789
    %v791 = vsel %vm790, %v783, %v787
    %v792 = vand.u32 2147483647, %v767
    %vm793 = vcmp.eq.f32.partialorder %v792, 8.507059e+37
    %v794 = vand.u32 %v767, 2147483648
    %v795 = vor.u32 1.1754944e-38, %v794
    %v796 = vsel %vm793, %v795, %v791
    %v797 = vmul.f32 %v739, %v796
    %v798 = vld [vmem:[%s3 + $0x18] sm:$0xff]
    %v799 = vld [vmem:[%s3 + $0x38] sm:$0xff]
    %v800 = vld [vmem:[%s3 + $0x58] sm:$0xff]
    %v801 = vld [vmem:[%s3 + $0x78] sm:$0xff]
    %v802 = vld [vmem:[%s3 + $0x98] sm:$0xff]
    %v803 = vld [vmem:[%s3 + $0xb8] sm:$0xff]
    %v804 = vld [vmem:[%s3 + $0xd8] sm:$0xff]
    %v805 = vld [vmem:[%s3 + $0xf8] sm:$0xff]
    %v806 = vld [vmem:[#allocation2 + $0x6] sm:$0x1]
    %v808 = vperm.slane %v806, 0
    %v810 = vadd.f32 %v808, 0.0
    %812 = vset.pattern.permute.xlu0 0
    %813 = vperm.xlu0 %812, %v782
    %v814 = vpop.permute.xlu0 %813
    %817 = vset.pattern.permute.xlu0 0
    %818 = vperm.xlu0 %817, %v797
    %v819 = vpop.permute.xlu0 %818
    %v821 = vmul.f32 %v814, %v576
    %v822 = vmul.f32 %v819, %v579
    %v823 = vadd.f32 %v821, 0.0
    %v824 = vadd.f32 %v822, 0.0
    %825 = vset.pattern.permute.xlu0 1
    %826 = vperm.xlu0 %825, %v782
    %v827 = vpop.permute.xlu0 %826
    %829 = vset.pattern.permute.xlu0 1
    %830 = vperm.xlu0 %829, %v797
    %v831 = vpop.permute.xlu0 %830
    %v833 = vmul.f32 %v827, %v576
    %v834 = vmul.f32 %v831, %v579
    %837 = vrot.lane.b32.xlu0 %v833, 96
    %v838 = vpop.permute.xlu0 %837
    %839 = vrot.lane.b32.xlu0 %v834, 96
    %v840 = vpop.permute.xlu0 %839
    %v843 = vadd.f32 %v823, %v838
    %v844 = vadd.f32 %v824, %v840
    %v846 = vsel %vm233, %v843, 0
    %v849 = vsel %vm233, %v844, 0
    %851 = vmatpush.msra.mxu0 0.0
    %852 = vmatpush.msra.mxu0 0.0
    %853 = vmatpush.msra.mxu0 0.0
    %854 = vmatpush.msra.mxu0 0.0
    %855 = vmatpush.msra.mxu0 0.0
    %856 = vmatpush.msra.mxu0 0.0
    %857 = vmatpush.msra.mxu0 0.0
    %858 = vmatpush.msra.mxu0 0.0
    %859 = vmatpush.msra.mxu0 0.0
    %860 = vmatpush.msra.mxu0 0.0
    %861 = vmatpush.msra.mxu0 0.0
    %862 = vmatpush.msra.mxu0 0.0
    %863 = vmatpush.msra.mxu0 %v801
    %864 = vmatpush.msra.mxu0 %v800
    %865 = vmatpush.msra.mxu0 %v799
    %866 = vmatpush.msra.mxu0 %v798
    %867 = vmatmul.f32.gmra.mxu0 %v846
    %v868 = vpop.f32.mrf.mxu0
    %v869 = vadd.f32 0.0, %v868
    %870 = vmatmul.f32.gmra.mxu0 %v849
    %v871 = vpop.f32.mrf.mxu0
    %v872 = vadd.f32 0.0, %v871
    %873 = vdwg.mxu0
    %v874 = vadd.f32 %v810, %v869
    %v875 = vadd.f32 %v810, %v872
    %876 = vset.pattern.permute.xlu0 2
    %877 = vperm.xlu0 %876, %v782
    %v878 = vpop.permute.xlu0 %877
    %880 = vset.pattern.permute.xlu0 2
    %881 = vperm.xlu0 %880, %v797
    %v882 = vpop.permute.xlu0 %881
    %v884 = vmul.f32 %v878, %v576
    %v885 = vmul.f32 %v882, %v579
    %v886 = vadd.f32 %v884, 0.0
    %v887 = vadd.f32 %v885, 0.0
    %888 = vset.pattern.permute.xlu0 3
    %889 = vperm.xlu0 %888, %v782
    %v890 = vpop.permute.xlu0 %889
    %892 = vset.pattern.permute.xlu0 3
    %893 = vperm.xlu0 %892, %v797
    %v894 = vpop.permute.xlu0 %893
    %v896 = vmul.f32 %v890, %v576
    %v897 = vmul.f32 %v894, %v579
    %900 = vrot.lane.b32.xlu0 %v896, 96
    %v901 = vpop.permute.xlu0 %900
    %902 = vrot.lane.b32.xlu0 %v897, 96
    %v903 = vpop.permute.xlu0 %902
    %v906 = vadd.f32 %v886, %v901
    %v907 = vadd.f32 %v887, %v903
    %v909 = vsel %vm233, %v906, 0
    %v912 = vsel %vm233, %v907, 0
    %914 = vmatpush.msra.mxu0 0.0
    %915 = vmatpush.msra.mxu0 0.0
    %916 = vmatpush.msra.mxu0 0.0
    %917 = vmatpush.msra.mxu0 0.0
    %918 = vmatpush.msra.mxu0 0.0
    %919 = vmatpush.msra.mxu0 0.0
    %920 = vmatpush.msra.mxu0 0.0
    %921 = vmatpush.msra.mxu0 0.0
    %922 = vmatpush.msra.mxu0 0.0
    %923 = vmatpush.msra.mxu0 0.0
    %924 = vmatpush.msra.mxu0 0.0
    %925 = vmatpush.msra.mxu0 0.0
    %926 = vmatpush.msra.mxu0 %v805
    %927 = vmatpush.msra.mxu0 %v804
    %928 = vmatpush.msra.mxu0 %v803
    %929 = vmatpush.msra.mxu0 %v802
    %930 = vmatmul.f32.gmra.mxu0 %v909
    %v931 = vpop.f32.mrf.mxu0
    %v932 = vadd.f32 0.0, %v931
    %933 = vmatmul.f32.gmra.mxu0 %v912
    %v934 = vpop.f32.mrf.mxu0
    %v935 = vadd.f32 0.0, %v934
    %936 = vdwg.mxu0
    %v937 = vadd.f32 %v874, %v932
    %v938 = vadd.f32 %v875, %v935
    %v939 = vmul.f32 %v937, %v451
    %v940 = vmul.f32 %v938, %v452
    %v941 = vmul.f32 %v939, %v939
    %v942 = vmul.f32 %v940, %v940
    %v943 = vsel %vm233, %v941, 0.0
    %944 = vadd.xlane.f32.xlu0 %v943
    %v945 = vpop.xlane.xlu0 %944
    %v946 = vsel %vm233, %v942, 0.0
    %947 = vadd.xlane.f32.xlu0 %v946
    %v948 = vpop.xlane.xlu0 %947
    %v949 = vmax.f32 %v945, 1e-24
    %v950 = vmax.f32 %v948, 1e-24
    %v951 = vrsqrt.pop %v949
    %v952 = vmul.f32 %v951, %v949
    %v953 = vmul.f32 %v952, %v951
    %v954 = vmul.f32 0.5, %v953
    %v955 = vsub.f32 1.5, %v954
    %v956 = vmul.f32 %v951, %v955
    %vm957 = vweird.f32 %v949
    %vm958 = vweird.f32 %v951
    %vm959 = vmor %vm957, %vm958
    %v960 = vsel %vm959, %v951, %v956
    %v961 = vrsqrt.pop %v950
    %v962 = vmul.f32 %v961, %v950
    %v963 = vmul.f32 %v962, %v961
    %v964 = vmul.f32 0.5, %v963
    %v965 = vsub.f32 1.5, %v964
    %v966 = vmul.f32 %v961, %v965
    %vm967 = vweird.f32 %v950
    %vm968 = vweird.f32 %v961
    %vm969 = vmor %vm967, %vm968
    %v970 = vsel %vm969, %v961, %v966
    %v971 = vmul.f32 %v939, %v960
    %v972 = vmul.f32 %v940, %v970
    %973 = vrot.lane.b32.xlu0 %v169, 96
    %v974 = vpop.permute.xlu0 %973
    %v975 = vsel %vm171, %v974, 0
    %977 = vmatpush.msra.mxu0 0.0
    %978 = vmatpush.msra.mxu0 0.0
    %979 = vmatpush.msra.mxu0 0.0
    %980 = vmatpush.msra.mxu0 0.0
    %981 = vmatpush.msra.mxu0 0.0
    %982 = vmatpush.msra.mxu0 0.0
    %983 = vmatpush.msra.mxu0 0.0
    %984 = vmatpush.msra.mxu0 0.0
    %985 = vmatpush.msra.mxu0 0.0
    %986 = vmatpush.msra.mxu0 0.0
    %987 = vmatpush.msra.mxu0 0.0
    %988 = vmatpush.msra.mxu0 0.0
    %989 = vmatpush.msra.mxu0 0.0
    %990 = vmatpush.msra.mxu0 0.0
    %991 = vmatpush.msra.mxu0 %v972
    %992 = vmatpush.msra.mxu0 %v971
    %993 = vmatmul.f32.gmra.mxu0 %v975
    %v994 = vpop.f32.mrf.mxu0
    %v995 = vadd.f32 0.0, %v994
    %996 = vdwg.mxu0
    %vm997 = vcmask 254976
    %998 = vst.msk [vmem:[#allocation5] sm:$0x3] %vm997, %v995
    // Predicated region
    $region26: #{weight_sum_forward.1} parent=1 // pred_check
      _
    $region27: #{weight_sum_forward.1} parent=1 // pred_check_branch
      %1000 = sbr.rel (0) target = $region29
    $region28: #{weight_sum_forward.1} parent=1 // pred_region
      %1002 = vsyncadd [#allocation4], 0
      %s1004 = sshll.u32 [#allocation5], 4
      %s1005 = int_to_ptr.vmem [resolvable:$true] %s1004
      %s1006 = sshll.u32 %s5, 4
      %s1007 = int_to_ptr.hbm [resolvable:$true] %s1006
      %1009 = dma.vmem_to_hbm [thread:$0]  %s1005, 32, %s1007, [#allocation4]
    $region29: #{weight_sum_forward.1} parent=1 // pred_fallthru
      _
    // Predicated region
    $region30: #{weight_sum_forward.1} parent=1 // pred_check
      _
    $region31: #{weight_sum_forward.1} parent=1 // pred_check_branch
      %1011 = sbr.rel (0) target = $region33
    $region32: #{weight_sum_forward.1} parent=1 // pred_region
      %1013 = dma.done [#allocation4], 32
    $region33: #{weight_sum_forward.1} parent=1 // pred_fallthru
      _
    %1014 = vsyncpa [#allocation3], 1
    %1015 = vsyncpa [#allocation4], 1

</llo_original>
